<compile_context>
chip_gen: v6e
topology: v6e:2x2x1
jax: 0.10.0
libtpu: 0.0.40
codegen_flags: <defaults>
</compile_context>

<pallas_src>
import numpy as np

import jax
import jax.numpy as jnp
from jax.experimental import pallas as pl
from jax.experimental.pallas import tpu as pltpu

_MIB = 1024 * 1024


# --------------------------------------------------------------------------
# Kernel body: one (tb, td) tile -> both views written from a single read.
# --------------------------------------------------------------------------
def _two_view_kernel(x_ref, scale_ref, bias_ref, out0_ref, out1_ref):
    """x_ref: (tb, td) VMEM tile; scale_ref/bias_ref: (2,) SMEM scalars."""
    x = x_ref[...].astype(jnp.float32)
    out0_ref[...] = (x * scale_ref[0] + bias_ref[0]).astype(out0_ref.dtype)
    out1_ref[...] = (x * scale_ref[1] + bias_ref[1]).astype(out1_ref.dtype)


# --------------------------------------------------------------------------
# VMEM-budget-driven tile planning (per TPU generation).
# --------------------------------------------------------------------------
def _vmem_capacity_bytes():
    """Physical VMEM per TensorCore (v7x: 64 MiB, v5e/v6e: 128 MiB)."""
    try:
        cap = int(pltpu.get_tpu_info().vmem_capacity_bytes)
        return min(max(cap, 32 * _MIB), 128 * _MIB)
    except Exception:
        return 64 * _MIB  # smallest generation (v7x) -> safe everywhere


def _sublane_pack(itemsize):
    # packed-tile sublane requirement: u8 -> 32, bf16/f16 -> 16, f32 -> 8
    return {1: 32, 2: 16, 4: 8}.get(int(itemsize), 8)


def _plan_tiles(B, D, in_itemsize, out_itemsize):
    """Return (tb, td, vmem_limit_bytes)."""
    vmem = _vmem_capacity_bytes()
    vmem_limit = int(vmem * 0.7)          # leave headroom for compiler scratch
    pipeline_budget = vmem // 3           # our buffers use well under the limit

    # bytes per element held in VMEM: (1 in + 2 out) tiles, double-buffered
    bytes_per_elem = 2 * (in_itemsize + 2 * out_itemsize)

    # ---- row tile -----------------------------------------------------
    pack = max(_sublane_pack(in_itemsize), _sublane_pack(out_itemsize))
    if B % pack == 0:
        tb = min(B, 256)
        tb -= tb % pack
        while B % tb:
            tb -= pack
    else:
        tb = B  # full array dim is always a legal block size

    # ---- lane tile (carries the VMEM budget) ---------------------------
    if D % 128 == 0:
        max_td = max(128, (pipeline_budget // max(1, tb * bytes_per_elem)) // 128 * 128)
        n = D // 128
        d = max(1, min(n, max_td // 128))
        while n % d:
            d -= 1
        td = 128 * d
    else:
        td = D  # ragged feature dim -> full-extent lane block (no pad/slice)

    # ---- guarantee >=2 grid blocks so both v7x TensorCores get work ----
    if (B // tb) * (D // td) < 2:
        if td % 256 == 0:
            td //= 2
        elif tb % (2 * pack) == 0:
            tb //= 2

    return tb, td, vmem_limit


# --------------------------------------------------------------------------
# pallas_call wrapper
# --------------------------------------------------------------------------
def two_view_transform(x_flat, scales, biases, *, out_dtype=None):
    """x_flat: (B, D). Returns (view0, view1), each (B, D) of out_dtype."""
    B, D = x_flat.shape
    in_dtype = jnp.dtype(x_flat.dtype)
    if out_dtype is None:
        out_dtype = in_dtype if jnp.issubdtype(in_dtype, jnp.floating) else jnp.float32
    out_dtype = jnp.dtype(out_dtype)

    tb, td, vmem_limit = _plan_tiles(B, D, in_dtype.itemsize, out_dtype.itemsize)
    grid = (B // tb, D // td)

    tile_spec = pl.BlockSpec((tb, td), lambda i, j: (i, j))

    return pl.pallas_call(
        _two_view_kernel,
        out_shape=(
            jax.ShapeDtypeStruct((B, D), out_dtype),
            jax.ShapeDtypeStruct((B, D), out_dtype),
        ),
        grid=grid,
        in_specs=[
            tile_spec,                                          # image tile
            pl.BlockSpec(memory_space=pltpu.MemorySpace.SMEM),  # per-view scales
            pl.BlockSpec(memory_space=pltpu.MemorySpace.SMEM),  # per-view biases
        ],
        out_specs=(
            pl.BlockSpec((tb, td), lambda i, j: (i, j)),
            pl.BlockSpec((tb, td), lambda i, j: (i, j)),
        ),
        compiler_params=pltpu.CompilerParams(
            dimension_semantics=("parallel", "parallel"),
            vmem_limit_bytes=vmem_limit,
        ),
    )(x_flat, scales, biases)


# --------------------------------------------------------------------------
# Module wrapper
# --------------------------------------------------------------------------
class BaseCollateFunction:
    """JAX/Pallas re-implementation of lightly's BaseCollateFunction.

    Turns a batch of (image, label, filename) tuples into
    ((view0_batch, view1_batch), labels, filenames), where the two views are
    produced by a per-view transform applied to every image.
    """

    # TODO(synk): generic torchvision T.Compose transforms (stochastic PIL
    # augmentations, random crops, ...) cannot be expressed as a Pallas
    # kernel; modelled here as two deterministic per-view affine transforms.
    def __init__(self, scale0=1.0, bias0=0.0, scale1=1.0, bias1=0.0, out_dtype=None):
        self.scales = jnp.asarray([scale0, scale1], dtype=jnp.float32)
        self.biases = jnp.asarray([bias0, bias1], dtype=jnp.float32)
        self.out_dtype = out_dtype

        scales, biases, odt = self.scales, self.biases, out_dtype

        # Single jitted device portion: reshape -> kernel -> reshape.
        @jax.jit
        def _views(imgs):
            B = imgs.shape[0]
            x_flat = imgs.reshape(B, -1)
            v0, v1 = two_view_transform(x_flat, scales, biases, out_dtype=odt)
            return v0.reshape(imgs.shape), v1.reshape(imgs.shape)

        self._views = _views

    def __call__(self, batch):
        """batch: list of (img, label, fname) tuples; img is (C, H, W)."""
        imgs_list = [img for img, _, _ in batch]
        if isinstance(imgs_list[0], jax.Array):
            imgs = jnp.stack(imgs_list)
        else:
            # one host-side stack + a single H2D transfer (no per-image copies)
            imgs = jnp.asarray(np.stack([np.asarray(img) for img in imgs_list]))

        view0, view1 = self._views(imgs)

        # TODO(synk): torch.LongTensor is int64; TPU has no native int64 path,
        # so labels are kept int32 (cast on host if a consumer requires int64).
        labels = jnp.asarray([label for _, label, _ in batch], dtype=jnp.int32)
        fnames = [fname for _, _, fname in batch]
        return (view0, view1), labels, fnames

    # match nn.Module-style call
    forward = __call__


if __name__ == "__main__":
    key = jax.random.PRNGKey(0)
    B, C, H, W = 2, 4, 16, 16
    imgs = jax.random.normal(key, (B, C, H, W), dtype=jnp.float32)

    # batch of (img, label, fname) tuples, as the PyTorch module expects
    batch = [(imgs[i], int(i), f"img_{i}.png") for i in range(B)]

    # two deterministic "views" standing in for the random transform
    s0, b0 = 1.0, 0.0
    s1, b1 = 0.5, 0.25
    collate_fn = BaseCollateFunction(scale0=s0, bias0=b0, scale1=s1, bias1=b1)

    (view0, view1), labels, fnames = collate_fn(batch)
    jax.block_until_ready(view0)
    jax.block_until_ready(view1)
    jax.block_until_ready(labels)

    # sanity check against the pure-JAX reference of the modelled transforms
    ref0 = imgs * s0 + b0
    ref1 = imgs * s1 + b1
    assert view0.shape == (B, C, H, W) and view1.shape == (B, C, H, W)
    assert jnp.allclose(view0, ref0, atol=1e-6), "view 0 mismatch"
    assert jnp.allclose(view1, ref1, atol=1e-6), "view 1 mismatch"
    assert labels.dtype == jnp.int32 and labels.shape == (B,)
    assert fnames == ["img_0.png", "img_1.png"]

    print("KERNEL_OK")
</pallas_src>

<mosaic_0001>
module attributes {stable_mosaic.version = 11 : i64} {
  func.func @_two_view_kernel(%arg0: i32, %arg1: i32, %arg2: memref<2x512xf32, #tpu.memory_space<vmem>>, %arg3: memref<2xf32, #tpu.memory_space<smem>>, %arg4: memref<2xf32, #tpu.memory_space<smem>>, %arg5: memref<2x512xf32, #tpu.memory_space<vmem>>, %arg6: memref<2x512xf32, #tpu.memory_space<vmem>>) attributes {dimension_semantics = [#tpu.dimension_semantics<parallel>, #tpu.dimension_semantics<parallel>], iteration_bounds = array<i64: 1, 2>, scalar_prefetch = 0 : i64, scratch_operands = 0 : i64, tpu.core_type = #tpu.core_type<tc>, window_params = [{transform_indices = @transform_0, window_bounds = array<i64: 2, 512>}, {transform_indices = @transform_1, window_bounds = array<i64: 2>}, {transform_indices = @transform_2, window_bounds = array<i64: 2>}, {transform_indices = @transform_3, window_bounds = array<i64: 2, 512>}, {transform_indices = @transform_4, window_bounds = array<i64: 2, 512>}]} {
    %c0 = arith.constant 0 : index
    %c0_0 = arith.constant 0 : index
    %0 = vector.load %arg2[%c0, %c0_0] : memref<2x512xf32, #tpu.memory_space<vmem>>, vector<2x512xf32>
    %c0_1 = arith.constant 0 : index
    %1 = memref.load %arg3[%c0_1] : memref<2xf32, #tpu.memory_space<smem>>
    %2 = vector.broadcast %1 : f32 to vector<2x512xf32>
    %3 = arith.mulf %0, %2 : vector<2x512xf32>
    %c0_2 = arith.constant 0 : index
    %4 = memref.load %arg4[%c0_2] : memref<2xf32, #tpu.memory_space<smem>>
    %5 = vector.broadcast %4 : f32 to vector<2x512xf32>
    %6 = arith.addf %3, %5 : vector<2x512xf32>
    %c0_3 = arith.constant 0 : index
    %c0_4 = arith.constant 0 : index
    %7 = vector.load %arg5[%c0_3, %c0_4] : memref<2x512xf32, #tpu.memory_space<vmem>>, vector<2x512xf32>
    tpu.vector_store %arg5[%c0_3, %c0_4], %6 {strides = array<i32>} : memref<2x512xf32, #tpu.memory_space<vmem>>, vector<2x512xf32>,
    %c1 = arith.constant 1 : index
    %8 = memref.load %arg3[%c1] : memref<2xf32, #tpu.memory_space<smem>>
    %9 = vector.broadcast %8 : f32 to vector<2x512xf32>
    %10 = arith.mulf %0, %9 : vector<2x512xf32>
    %c1_5 = arith.constant 1 : index
    %11 = memref.load %arg4[%c1_5] : memref<2xf32, #tpu.memory_space<smem>>
    %12 = vector.broadcast %11 : f32 to vector<2x512xf32>
    %13 = arith.addf %10, %12 : vector<2x512xf32>
    %c0_6 = arith.constant 0 : index
    %c0_7 = arith.constant 0 : index
    %14 = vector.load %arg6[%c0_6, %c0_7] : memref<2x512xf32, #tpu.memory_space<vmem>>, vector<2x512xf32>
    tpu.vector_store %arg6[%c0_6, %c0_7], %13 {strides = array<i32>} : memref<2x512xf32, #tpu.memory_space<vmem>>, vector<2x512xf32>,
    return
  }
  func.func @transform_0(%arg0: i32, %arg1: i32) -> (i32, i32) {
    %c0_i32 = arith.constant 0 : i32
    return %arg0, %arg1 : i32, i32
  }
  func.func @transform_1(%arg0: i32, %arg1: i32) -> i32 {
    %c0_i32 = arith.constant 0 : i32
    %c0_i32_0 = arith.constant 0 : i32
    return %c0_i32 : i32
  }
  func.func @transform_2(%arg0: i32, %arg1: i32) -> i32 {
    %c0_i32 = arith.constant 0 : i32
    %c0_i32_0 = arith.constant 0 : i32
    return %c0_i32 : i32
  }
  func.func @transform_3(%arg0: i32, %arg1: i32) -> (i32, i32) {
    %c0_i32 = arith.constant 0 : i32
    return %arg0, %arg1 : i32, i32
  }
  func.func @transform_4(%arg0: i32, %arg1: i32) -> (i32, i32) {
    %c0_i32 = arith.constant 0 : i32
    return %arg0, %arg1 : i32, i32
  }
}

</mosaic_0001>

<llo_original>
// kernel: _views.1
$region0: #{_views.1}
  #allocation0 [shape = 'u32[]', space=smem, size = 0x4, offset = 0x4, fixed_abs, tag = 'smem constant byte address 0x4 - core index']
  #allocation1 [shape = 'u32[144,128]{1,0:T(1,128)}', space=vmem, size = 0x12000, scoped, tag = 'internal scratch']
  %s0 = inlined_call_operand.vmem [shape: f32[2,1024], index: 0, kind: input, shape index: {}]
  %s1 = inlined_call_operand.vmem [shape: f32[2], index: 1, kind: input, shape index: {}]
  %s2 = inlined_call_operand.vmem [shape: f32[2], index: 2, kind: input, shape index: {}]
  %s3 = inlined_call_operand.vmem [shape: f32[2,1024], index: 3, kind: output, shape index: {0}]
  %s4 = inlined_call_operand.vmem [shape: f32[2,1024], index: 4, kind: output, shape index: {1}]
  %5 = xla_tuple %s3, %s4
  %s6 = sld [smem:[#allocation0]]
  $region61: #{_views.1} parent=0
    _
  %s8 = ssub.s32 1, %s6
  %s9 = scalar_select 0, %s8, %s6
  $region1: #{_views.1} parent=0
    #allocation2 [shape = 'u8[512]{0}', space=smem, size = 0x200, scoped, tag = 'input window, operand 1, single buffered']
    #allocation3 [shape = 's32[2]{0}', space=sflag, size = 0x8, scoped, tag = 'scoped memory for _views.1']
    #allocation4 [shape = 'u8[512]{0}', space=smem, size = 0x200, scoped, tag = 'input window, operand 2, single buffered']
    #allocation5 [shape = 's32[1]{0}', space=sflag, size = 0x4, scoped, tag = 'scoped memory for _views.1']
    %10 = vsyncpa [#allocation3], 0
    %11 = vsyncpa [#allocation5], 0
    loop: start=0, step=1, limit=4
    $region2: #{_views.1} parent=1 // loop_pre_header
      _
    $region3: #{_views.1} parent=1 // loop_header
      %s13 = sphi 0, %s17
      %p14 = scmp.ge.s32.totalorder %s13, 4
      %s20 = sphi 0, %s32
      %s21 = sphi 0, %s28
      %s22 = sphi 0, %s20
      %s23 = sphi 0, %s21
      %s24 = sphi 0, %s22
      %s25 = sphi 0, %s23
      %s37 = sphi 0, %s39
      %s40 = sphi 0, %s37
      %s41 = sphi 0, %s40
      %s57 = sphi 0, %s41
      %s61 = sphi 0, %s61
      %s63 = sphi 0, %s61
      %s64 = sphi 0, %s63
      %s78 = sphi 0, %s64
      %s82 = sphi 0, %s82
      %s84 = sphi 0, %s82
      %s85 = sphi 0, %s84
      %s99 = sphi 0, %s85
      %s107 = sphi 0, %s109
      %s110 = sphi 0, %s107
      %s111 = sphi 0, %s110
      %s127 = sphi 0, %s111
      %s135 = sphi 0, %s137
      %s138 = sphi 0, %s135
      %s139 = sphi 0, %s138
      %s155 = sphi 0, %s139
    $region4: #{_views.1} parent=1 // loop_header_branch
      %16 = sbr.rel (%p14) target = $region8
    $region5: #{_views.1} parent=1 // loop_body
      %s18 = ssub.s32 %s13, 1
      %s19 = ssub.s32 %s13, 2
      %s26 = sadd.s32 1, %s21
      %p27 = scmp.ge.s32.totalorder %s26, 2
      %s28 = scalar_select %p27, 0, %s26
      %s29 = sadd.s32 1, %s20
      %s30 = scalar_select %p27, %s29, %s20
      %p31 = scmp.ge.s32.totalorder %s30, 1
      %s32 = scalar_select %p31, 0, %s30
      %s33 = ssub.s32 %s20, %s32
      %s34 = ssub.s32 %s21, %s28
      %s35 = sor.u32 %s33, %s34
      %p36 = scmp.eq.s32.totalorder %s35, 0
      %s38 = sadd.s32 %s37, 1
      %s39 = scalar_select %p36, %s37, %s38
      %p42 = pneg %p36
      %p43 = scmp.eq.s32.totalorder %s13, 1
      %p44 = por %p42, %p43
      %p45 = scmp.ne.s32.totalorder %s37, %s40
      %p46 = scmp.eq.s32.totalorder %s13, 0
      %p47 = por %p45, %p46
      %p48 = scmp.ne.s32.totalorder %s37, %s40
      %p49 = scmp.eq.s32.totalorder %s18, 1
      %p50 = por %p48, %p49
      %p51 = scmp.ne.s32.totalorder %s40, %s41
      %p52 = scmp.eq.s32.totalorder %s18, 0
      %p53 = por %p51, %p52
      %p54 = scmp.ne.s32.totalorder %s40, %s41
      %p55 = scmp.eq.s32.totalorder %s19, 1
      %p56 = por %p54, %p55
      %p58 = scmp.ne.s32.totalorder %s41, %s57
      %p59 = scmp.eq.s32.totalorder %s19, 0
      %p60 = por %p58, %p59
      %s62 = sadd.s32 %s61, 1
      %p65 = scmp.eq.s32.totalorder %s13, 1
      %p66 = scmp.ne.s32.totalorder %s61, %s63
      %p67 = scmp.eq.s32.totalorder %s13, 0
      %p68 = por %p66, %p67
      %p69 = scmp.ne.s32.totalorder %s61, %s63
      %p70 = scmp.eq.s32.totalorder %s18, 1
      %p71 = por %p69, %p70
      %p72 = scmp.ne.s32.totalorder %s63, %s64
      %p73 = scmp.eq.s32.totalorder %s18, 0
      %p74 = por %p72, %p73
      %p75 = scmp.ne.s32.totalorder %s63, %s64
      %p76 = scmp.eq.s32.totalorder %s19, 1
      %p77 = por %p75, %p76
      %p79 = scmp.ne.s32.totalorder %s64, %s78
      %p80 = scmp.eq.s32.totalorder %s19, 0
      %p81 = por %p79, %p80
      %s83 = sadd.s32 %s82, 1
      %p86 = scmp.eq.s32.totalorder %s13, 1
      %p87 = scmp.ne.s32.totalorder %s82, %s84
      %p88 = scmp.eq.s32.totalorder %s13, 0
      %p89 = por %p87, %p88
      %p90 = scmp.ne.s32.totalorder %s82, %s84
      %p91 = scmp.eq.s32.totalorder %s18, 1
      %p92 = por %p90, %p91
      %p93 = scmp.ne.s32.totalorder %s84, %s85
      %p94 = scmp.eq.s32.totalorder %s18, 0
      %p95 = por %p93, %p94
      %p96 = scmp.ne.s32.totalorder %s84, %s85
      %p97 = scmp.eq.s32.totalorder %s19, 1
      %p98 = por %p96, %p97
      %p100 = scmp.ne.s32.totalorder %s85, %s99
      %p101 = scmp.eq.s32.totalorder %s19, 0
      %p102 = por %p100, %p101
      %s103 = ssub.s32 %s20, %s32
      %s104 = ssub.s32 %s21, %s28
      %s105 = sor.u32 %s103, %s104
      %p106 = scmp.eq.s32.totalorder %s105, 0
      %s108 = sadd.s32 %s107, 1
      %s109 = scalar_select %p106, %s107, %s108
      %p112 = pneg %p106
      %p113 = scmp.eq.s32.totalorder %s13, 1
      %p114 = por %p112, %p113
      %p115 = scmp.ne.s32.totalorder %s107, %s110
      %p116 = scmp.eq.s32.totalorder %s13, 0
      %p117 = por %p115, %p116
      %p118 = scmp.ne.s32.totalorder %s107, %s110
      %p119 = scmp.eq.s32.totalorder %s18, 1
      %p120 = por %p118, %p119
      %p121 = scmp.ne.s32.totalorder %s110, %s111
      %p122 = scmp.eq.s32.totalorder %s18, 0
      %p123 = por %p121, %p122
      %p124 = scmp.ne.s32.totalorder %s110, %s111
      %p125 = scmp.eq.s32.totalorder %s19, 1
      %p126 = por %p124, %p125
      %p128 = scmp.ne.s32.totalorder %s111, %s127
      %p129 = scmp.eq.s32.totalorder %s19, 0
      %p130 = por %p128, %p129
      %s131 = ssub.s32 %s20, %s32
      %s132 = ssub.s32 %s21, %s28
      %s133 = sor.u32 %s131, %s132
      %p134 = scmp.eq.s32.totalorder %s133, 0
      %s136 = sadd.s32 %s135, 1
      %s137 = scalar_select %p134, %s135, %s136
      %p140 = pneg %p134
      %p141 = scmp.eq.s32.totalorder %s13, 1
      %p142 = por %p140, %p141
      %p143 = scmp.ne.s32.totalorder %s135, %s138
      %p144 = scmp.eq.s32.totalorder %s13, 0
      %p145 = por %p143, %p144
      %p146 = scmp.ne.s32.totalorder %s135, %s138
      %p147 = scmp.eq.s32.totalorder %s18, 1
      %p148 = por %p146, %p147
      %p149 = scmp.ne.s32.totalorder %s138, %s139
      %p150 = scmp.eq.s32.totalorder %s18, 0
      %p151 = por %p149, %p150
      %p152 = scmp.ne.s32.totalorder %s138, %s139
      %p153 = scmp.eq.s32.totalorder %s19, 1
      %p154 = por %p152, %p153
      %p156 = scmp.ne.s32.totalorder %s139, %s155
      %p157 = scmp.eq.s32.totalorder %s19, 0
      %p158 = por %p156, %p157
      %p159 = scmp.le.s32.totalorder 1, %s13
      %p160 = scmp.lt.s32.totalorder %s13, 3
      %p161 = pnand %p159, %p160
      %p162 = pneg %p161
      // Predicated region
      $region9: #{_views.1} parent=5 // pred_check
        _
      $region10: #{_views.1} parent=5 // pred_check_branch
        %164 = sbr.rel (%p161) target = $region12
      $region11: #{_views.1} parent=5 // pred_region
        %s165 = ssub.s32 %s13, 1
        // Predicated region
        $region13: #{_views.1} parent=11 // pred_check
          %p166 = pneg %p74
        $region14: #{_views.1} parent=11 // pred_check_branch
          %168 = sbr.rel (%p166) target = $region16
        $region15: #{_views.1} parent=11 // pred_region
          %s170 = ssub.s32 16, 16
          %171 = vsyncadd [#allocation3], %s170
          %s173 = sshll.u32 %s1, 4
          %s174 = int_to_ptr.vmem [resolvable:$true] %s173
          %176 = dma.vmem_to_smem %s174, 16, [#allocation2], [#allocation3]
        $region16: #{_views.1} parent=11 // pred_fallthru
          _
        // Predicated region
        $region17: #{_views.1} parent=11 // pred_check
          %p177 = pneg %p95
        $region18: #{_views.1} parent=11 // pred_check_branch
          %179 = sbr.rel (%p177) target = $region20
        $region19: #{_views.1} parent=11 // pred_region
          %s181 = ssub.s32 16, 16
          %182 = vsyncadd [#allocation5], %s181
          %s184 = sshll.u32 %s2, 4
          %s185 = int_to_ptr.vmem [resolvable:$true] %s184
          %187 = dma.vmem_to_smem %s185, 16, [#allocation4], [#allocation5]
        $region20: #{_views.1} parent=11 // pred_fallthru
          _
      $region12: #{_views.1} parent=5 // pred_fallthru
        _
      %p188 = scmp.lt.s32.totalorder %s13, 2
      // Predicated region
      $region21: #{_views.1} parent=5 // pred_check
        %p189 = pneg %p188
      $region22: #{_views.1} parent=5 // pred_check_branch
        %191 = sbr.rel (%p189) target = $region24
      $region23: #{_views.1} parent=5 // pred_region
        // Predicated region
        $region25: #{_views.1} parent=23 // pred_check
          %p192 = pneg %p47
        $region26: #{_views.1} parent=23 // pred_check_branch
          %194 = sbr.rel (%p192) target = $region28
        $region27: #{_views.1} parent=23 // pred_region
          %s195 = smul.u32 4, %s21
          %p196 = scmp.lt.s32.totalorder %s20, 0
          %s197 = scalar_select %p196, %s20, 0
          %p198 = scmp.lt.s32.totalorder %s195, 7
          %s199 = scalar_select %p198, %s195, 7
          %s200 = smul.addr %s197, 8
          %s201 = sadd.s32 %s199, %s200
          %s202 = smul.addr %s201, 2
          %s203 = scalar_lea.vmem %s0, %s202
          %s204 = smul.u32 4, %s21
        $region28: #{_views.1} parent=23 // pred_fallthru
          _
      $region24: #{_views.1} parent=5 // pred_fallthru
        _
      %p205 = scmp.le.s32.totalorder 1, %s13
      %p206 = scmp.lt.s32.totalorder %s13, 3
      %p207 = pnand %p205, %p206
      %p208 = pneg %p207
      // Predicated region
      $region29: #{_views.1} parent=5 // pred_check
        _
      $region30: #{_views.1} parent=5 // pred_check_branch
        %210 = sbr.rel (%p207) target = $region32
      $region31: #{_views.1} parent=5 // pred_region
        %s211 = ssub.s32 %s13, 1
        // Predicated region
        $region33: #{_views.1} parent=31 // pred_check
          %p212 = pneg %p74
        $region34: #{_views.1} parent=31 // pred_check_branch
          %214 = sbr.rel (%p212) target = $region36
        $region35: #{_views.1} parent=31 // pred_region
          %215 = dma.done [#allocation3], 16
        $region36: #{_views.1} parent=31 // pred_fallthru
          _
        // Predicated region
        $region37: #{_views.1} parent=31 // pred_check
          %p216 = pneg %p95
        $region38: #{_views.1} parent=31 // pred_check_branch
          %218 = sbr.rel (%p216) target = $region40
        $region39: #{_views.1} parent=31 // pred_region
          %219 = dma.done [#allocation5], 16
        $region40: #{_views.1} parent=31 // pred_fallthru
          _
        %220 = sfence
        %s221 = smul.u32 4, %s23
        %p222 = scmp.lt.s32.totalorder %s22, 0
        %s223 = scalar_select %p222, %s22, 0
        %p224 = scmp.lt.s32.totalorder %s221, 7
        %s225 = scalar_select %p224, %s221, 7
        %s226 = smul.addr %s223, 8
        %s227 = sadd.s32 %s225, %s226
        %s228 = smul.addr %s227, 2
        %s229 = scalar_lea.vmem %s0, %s228
        %p230 = pneg %p53
        %p231 = pneg %p50
        %p232 = pneg %p74
        %p233 = pneg %p71
        %p234 = pneg %p95
        %p235 = pneg %p92
        %p236 = pneg %p123
        %p237 = pneg %p120
        %s238 = smul.u32 4, %s23
        %p239 = scmp.lt.s32.totalorder %s22, 0
        %s240 = scalar_select %p239, %s22, 0
        %p241 = scmp.lt.s32.totalorder %s238, 7
        %s242 = scalar_select %p241, %s238, 7
        %s243 = smul.addr %s240, 8
        %s244 = sadd.s32 %s242, %s243
        %s245 = smul.addr %s244, 2
        %s246 = scalar_lea.vmem %s3, %s245
        %p247 = pneg %p151
        %p248 = pneg %p148
        %s249 = smul.u32 4, %s23
        %p250 = scmp.lt.s32.totalorder %s22, 0
        %s251 = scalar_select %p250, %s22, 0
        %p252 = scmp.lt.s32.totalorder %s249, 7
        %s253 = scalar_select %p252, %s249, 7
        %s254 = smul.addr %s251, 8
        %s255 = sadd.s32 %s253, %s254
        %s256 = smul.addr %s255, 2
        %s257 = scalar_lea.vmem %s4, %s256
        %s258 = smul.u32 4, %s23
        %p259 = scmp.lt.s32.totalorder %s22, 0
        %s260 = scalar_select %p259, %s22, 0
        %p261 = scmp.lt.s32.totalorder %s258, 7
        %s262 = scalar_select %p261, %s258, 7
        %s263 = smul.addr %s260, 8
        %s264 = sadd.s32 %s262, %s263
        %s265 = smul.addr %s264, 2
        %s266 = scalar_lea.vmem %s0, %s265
        %s267 = smul.u32 4, %s23
        %s268 = smul.u32 4, %s23
        %p269 = scmp.lt.s32.totalorder %s22, 0
        %s270 = scalar_select %p269, %s22, 0
        %p271 = scmp.lt.s32.totalorder %s268, 7
        %s272 = scalar_select %p271, %s268, 7
        %s273 = smul.addr %s270, 8
        %s274 = sadd.s32 %s272, %s273
        %s275 = smul.addr %s274, 2
        %s276 = scalar_lea.vmem %s3, %s275
        %s277 = smul.u32 4, %s23
        %s278 = smul.u32 4, %s23
        %p279 = scmp.lt.s32.totalorder %s22, 0
        %s280 = scalar_select %p279, %s22, 0
        %p281 = scmp.lt.s32.totalorder %s278, 7
        %s282 = scalar_select %p281, %s278, 7
        %s283 = smul.addr %s280, 8
        %s284 = sadd.s32 %s282, %s283
        %s285 = smul.addr %s284, 2
        %s286 = scalar_lea.vmem %s4, %s285
        %s287 = smul.u32 4, %s23
        %v288 = vld [vmem:[%s266] sm:$0xff]
        %s289 = sld [smem:[#allocation2]]
        %v290 = vstv %s289
        %v291 = vmul.f32 %v288, %v290
        %s292 = sld [smem:[#allocation4]]
        %v293 = vstv %s292
        %v294 = vadd.f32 %v291, %v293
        %295 = vst [vmem:[%s276] sm:$0xff] %v294
        %s296 = sld [smem:[#allocation2 + $0x1]]
        %v297 = vstv %s296
        %v298 = vmul.f32 %v288, %v297
        %s299 = sld [smem:[#allocation4 + $0x1]]
        %v300 = vstv %s299
        %v301 = vadd.f32 %v298, %v300
        %302 = vst [vmem:[%s286] sm:$0xff] %v301
        %s303 = smul.u32 4, %s23
        %p304 = scmp.lt.s32.totalorder %s22, 0
        %s305 = scalar_select %p304, %s22, 0
        %p306 = scmp.lt.s32.totalorder %s303, 7
        %s307 = scalar_select %p306, %s303, 7
        %s308 = smul.addr %s305, 8
        %s309 = sadd.s32 %s307, %s308
        %s310 = smul.addr %s309, 2
        %s311 = scalar_lea.vmem %s3, %s310
        %s312 = smul.u32 4, %s23
        %p313 = scmp.lt.s32.totalorder %s22, 0
        %s314 = scalar_select %p313, %s22, 0
        %p315 = scmp.lt.s32.totalorder %s312, 7
        %s316 = scalar_select %p315, %s312, 7
        %s317 = smul.addr %s314, 8
        %s318 = sadd.s32 %s316, %s317
        %s319 = smul.addr %s318, 2
        %s320 = scalar_lea.vmem %s4, %s319
        // Predicated region
        $region41: #{_views.1} parent=31 // pred_check
          %p321 = pneg %p120
        $region42: #{_views.1} parent=31 // pred_check_branch
          %323 = sbr.rel (%p321) target = $region44
        $region43: #{_views.1} parent=31 // pred_region
          %s324 = smul.u32 4, %s23
        $region44: #{_views.1} parent=31 // pred_fallthru
          _
        // Predicated region
        $region45: #{_views.1} parent=31 // pred_check
          %p325 = pneg %p148
        $region46: #{_views.1} parent=31 // pred_check_branch
          %327 = sbr.rel (%p325) target = $region48
        $region47: #{_views.1} parent=31 // pred_region
          %s328 = smul.u32 4, %s23
        $region48: #{_views.1} parent=31 // pred_fallthru
          _
      $region32: #{_views.1} parent=5 // pred_fallthru
        _
      %p329 = scmp.le.s32.totalorder 2, %s13
      // Predicated region
      $region49: #{_views.1} parent=5 // pred_check
        %p330 = pneg %p329
      $region50: #{_views.1} parent=5 // pred_check_branch
        %332 = sbr.rel (%p330) target = $region52
      $region51: #{_views.1} parent=5 // pred_region
        %s333 = ssub.s32 %s13, 2
        // Predicated region
        $region53: #{_views.1} parent=51 // pred_check
          %p334 = pneg %p126
        $region54: #{_views.1} parent=51 // pred_check_branch
          %336 = sbr.rel (%p334) target = $region56
        $region55: #{_views.1} parent=51 // pred_region
          %s337 = smul.u32 4, %s25
          %p338 = scmp.lt.s32.totalorder %s24, 0
          %s339 = scalar_select %p338, %s24, 0
          %p340 = scmp.lt.s32.totalorder %s337, 7
          %s341 = scalar_select %p340, %s337, 7
          %s342 = smul.addr %s339, 8
          %s343 = sadd.s32 %s341, %s342
          %s344 = smul.addr %s343, 2
          %s345 = scalar_lea.vmem %s3, %s344
        $region56: #{_views.1} parent=51 // pred_fallthru
          _
        // Predicated region
        $region57: #{_views.1} parent=51 // pred_check
          %p346 = pneg %p154
        $region58: #{_views.1} parent=51 // pred_check_branch
          %348 = sbr.rel (%p346) target = $region60
        $region59: #{_views.1} parent=51 // pred_region
          %s349 = smul.u32 4, %s25
          %p350 = scmp.lt.s32.totalorder %s24, 0
          %s351 = scalar_select %p350, %s24, 0
          %p352 = scmp.lt.s32.totalorder %s349, 7
          %s353 = scalar_select %p352, %s349, 7
          %s354 = smul.addr %s351, 8
          %s355 = sadd.s32 %s353, %s354
          %s356 = smul.addr %s355, 2
          %s357 = scalar_lea.vmem %s4, %s356
        $region60: #{_views.1} parent=51 // pred_fallthru
          _
      $region52: #{_views.1} parent=5 // pred_fallthru
        _
    $region6: #{_views.1} parent=1 // loop_footer
      %s17 = sadd.s32 1, %s13
    $region7: #{_views.1} parent=1 // loop_footer_branch
      %12 = sbr.rel target = $region3
    $region8: #{_views.1} parent=1 // loop_exit
      _
    %358 = vsyncpa [#allocation3], 1
    %s359 = scalar_lea.sflag [#allocation3], 1
    %360 = vsyncpa %s359, 1
    %361 = vsyncpa [#allocation5], 1

</llo_original>
